<compile_context>
chip_gen: v7x
topology: tpu7x:2x2x1
jax: 0.10.0
libtpu: 0.0.40
codegen_flags: <defaults>
</compile_context>

<pallas_src>
import jax
import jax.numpy as jnp
from jax.experimental import pallas as pl
from jax.experimental.pallas import tpu as pltpu


def mlp_kernel(x_ref, w1_ref, b1_ref, w2_ref, b2_ref, w3_ref, b3_ref, o_ref):
    # Batch on sublanes; weights arrive pre-transposed as [in, out] so every
    # layer is a standard (m,k)x(k,n) MXU dot (no transposes anywhere).
    # Layer 1: Linear + ReLU   ([tb, obs] @ [obs, hidden] -> [tb, hidden])
    h1 = jnp.dot(x_ref[...], w1_ref[...], preferred_element_type=jnp.float32)
    h1 = jnp.maximum(h1 + b1_ref[...], 0.0)
    # Layer 2: Linear + ReLU   ([tb, hidden] @ [hidden, 56] -> [tb, 56])
    h2 = jnp.dot(h1, w2_ref[...], preferred_element_type=jnp.float32)
    h2 = jnp.maximum(h2 + b2_ref[...], 0.0)
    # Layer 3: Linear (no activation)   ([tb, 56] @ [56, n_act] -> [tb, n_act])
    out = jnp.dot(h2, w3_ref[...], preferred_element_type=jnp.float32)
    o_ref[...] = out + b3_ref[...]


def net_forward(x, params, *, batch_tile=4096):
    """x: [B, obs_size] f32; params: w1,b1,w2,b2,w3,b3 with W in PyTorch [out, in] layout."""
    w1, b1 = params["w1"], params["b1"]
    w2, b2 = params["w2"], params["b2"]
    w3, b3 = params["w3"], params["b3"]

    B, obs_size = x.shape
    hidden = w1.shape[0]
    mid = w2.shape[0]           # 56
    n_actions = w3.shape[0]

    # One-time tiny weight transposes (~9 KiB total) so the kernel needs no
    # transposes and x / output never take an extra wrapper-side HBM pass.
    w1t = w1.T                  # [obs, hidden]
    w2t = w2.T                  # [hidden, 56]
    w3t = w3.T                  # [56, n_actions]
    b1r = b1.reshape(1, hidden)
    b2r = b2.reshape(1, mid)
    b3r = b3.reshape(1, n_actions)

    # Batch tiling: no padding, ragged last block handled by Pallas (OOB rows
    # are simply not written back; there is no cross-row reduction).
    if B <= 256:
        tb = B                  # single full-array block for tiny batches
    else:
        # >= 2 grid steps: lets v7x shard batch tiles across both TensorCores
        # and keeps the x-in / out-writeback pipeline overlapping compute.
        tb = min(batch_tile, pl.cdiv(pl.cdiv(B, 2), 128) * 128)
    grid = (pl.cdiv(B, tb),)

    # Weights/biases stay resident in VMEM across all batch tiles.
    const = lambda a: pl.BlockSpec(a.shape, lambda i: (0, 0))

    flops = 2 * B * (obs_size * hidden + hidden * mid + mid * n_actions)
    bytes_accessed = 4 * (
        B * (obs_size + n_actions)
        + w1.size + w2.size + w3.size + b1.size + b2.size + b3.size
    )

    out = pl.pallas_call(
        mlp_kernel,
        out_shape=jax.ShapeDtypeStruct((B, n_actions), jnp.float32),
        grid=grid,
        in_specs=[
            pl.BlockSpec((tb, obs_size), lambda i: (i, 0)),   # streamed x tiles
            const(w1t), const(b1r),
            const(w2t), const(b2r),
            const(w3t), const(b3r),
        ],
        out_specs=pl.BlockSpec((tb, n_actions), lambda i: (i, 0)),
        compiler_params=pltpu.CompilerParams(
            dimension_semantics=("parallel",),      # v7x: both TCs; no-op on v5e/v6e
            vmem_limit_bytes=32 * 1024 * 1024,      # lane-padded 4k-row tiles ~12 MiB
        ),
        cost_estimate=pl.CostEstimate(
            flops=flops, transcendentals=0, bytes_accessed=bytes_accessed),
    )(x, w1t, b1r, w2t, b2r, w3t, b3r)

    return out                  # already [B, n_actions]; no wrapper transpose


def init_params(key, obs_size, hidden_size, n_actions):
    """Deterministic init mimicking nn.Linear default (uniform +-1/sqrt(fan_in)).
    Weights in PyTorch layout [out_features, in_features]."""
    ks = jax.random.split(key, 6)

    def linear(kw, kb, fan_in, fan_out):
        bound = 1.0 / jnp.sqrt(jnp.float32(fan_in))
        w = jax.random.uniform(kw, (fan_out, fan_in), jnp.float32, -bound, bound)
        b = jax.random.uniform(kb, (fan_out,), jnp.float32, -bound, bound)
        return w, b

    w1, b1 = linear(ks[0], ks[1], obs_size, hidden_size)
    w2, b2 = linear(ks[2], ks[3], hidden_size, 56)
    w3, b3 = linear(ks[4], ks[5], 56, n_actions)
    return dict(w1=w1, b1=b1, w2=w2, b2=b2, w3=w3, b3=b3)


def reference_forward(x, p):
    h1 = jnp.maximum(x @ p["w1"].T + p["b1"], 0.0)
    h2 = jnp.maximum(h1 @ p["w2"].T + p["b2"], 0.0)
    return h2 @ p["w3"].T + p["b3"]


if __name__ == "__main__":
    obs_size, hidden_size, n_actions = 8, 32, 4

    key = jax.random.PRNGKey(0)
    k_params, k_x1, k_x2 = jax.random.split(key, 3)
    params = init_params(k_params, obs_size, hidden_size, n_actions)

    # Small batch (single full-array block path), matching the module's spec.
    batch = 2
    x_small = jax.random.normal(k_x1, (batch, obs_size), jnp.float32)
    out_small = jax.block_until_ready(net_forward(x_small, params))
    ref_small = reference_forward(x_small, params)
    assert out_small.shape == (batch, n_actions)
    assert jnp.allclose(out_small, ref_small, atol=1e-5, rtol=1e-5)

    # Larger, non-tile-aligned batch: exercises the multi-step grid (>=2 steps,
    # parallel semantics) and the ragged last block (no jnp.pad anywhere).
    big_batch = 2305
    x_big = jax.random.normal(k_x2, (big_batch, obs_size), jnp.float32)
    out_big = jax.block_until_ready(net_forward(x_big, params))
    ref_big = reference_forward(x_big, params)
    assert out_big.shape == (big_batch, n_actions)
    assert jnp.allclose(out_big, ref_big, atol=1e-4, rtol=1e-4)

    print("KERNEL_OK")
</pallas_src>

<mosaic_0001>
module attributes {stable_mosaic.version = 11 : i64} {
  func.func @mlp_kernel(%arg0: i32, %arg1: memref<2x8xf32, #tpu.memory_space<vmem>>, %arg2: memref<8x32xf32, #tpu.memory_space<vmem>>, %arg3: memref<1x32xf32, #tpu.memory_space<vmem>>, %arg4: memref<32x56xf32, #tpu.memory_space<vmem>>, %arg5: memref<1x56xf32, #tpu.memory_space<vmem>>, %arg6: memref<56x4xf32, #tpu.memory_space<vmem>>, %arg7: memref<1x4xf32, #tpu.memory_space<vmem>>, %arg8: memref<2x4xf32, #tpu.memory_space<vmem>>) attributes {dimension_semantics = [#tpu.dimension_semantics<parallel>], iteration_bounds = array<i64: 1>, scalar_prefetch = 0 : i64, scratch_operands = 0 : i64, tpu.core_type = #tpu.core_type<tc>, window_params = [{transform_indices = @transform_0, window_bounds = array<i64: 2, 8>}, {pipeline_mode = #tpu.pipeline_mode<synchronous>, transform_indices = @transform_1, window_bounds = array<i64: 8, 32>}, {pipeline_mode = #tpu.pipeline_mode<synchronous>, transform_indices = @transform_2, window_bounds = array<i64: 1, 32>}, {pipeline_mode = #tpu.pipeline_mode<synchronous>, transform_indices = @transform_3, window_bounds = array<i64: 32, 56>}, {pipeline_mode = #tpu.pipeline_mode<synchronous>, transform_indices = @transform_4, window_bounds = array<i64: 1, 56>}, {pipeline_mode = #tpu.pipeline_mode<synchronous>, transform_indices = @transform_5, window_bounds = array<i64: 56, 4>}, {pipeline_mode = #tpu.pipeline_mode<synchronous>, transform_indices = @transform_6, window_bounds = array<i64: 1, 4>}, {transform_indices = @transform_7, window_bounds = array<i64: 2, 4>}]} {
    %c0 = arith.constant 0 : index
    %c0_0 = arith.constant 0 : index
    %0 = vector.load %arg1[%c0, %c0_0] : memref<2x8xf32, #tpu.memory_space<vmem>>, vector<2x8xf32>
    %c0_1 = arith.constant 0 : index
    %c0_2 = arith.constant 0 : index
    %1 = vector.load %arg2[%c0_1, %c0_2] : memref<8x32xf32, #tpu.memory_space<vmem>>, vector<8x32xf32>
    %cst = arith.constant dense<0.000000e+00> : vector<2x32xf32>
    %2 = tpu.matmul %0, %1, %cst {dimension_numbers = #tpu.dot_dimension_numbers<[1], [0], [0], [1], [0, 0, 1, 1], [], []>} : vector<2x8xf32>, vector<8x32xf32>, vector<2x32xf32> -> vector<2x32xf32>
    %c0_3 = arith.constant 0 : index
    %c0_4 = arith.constant 0 : index
    %3 = vector.load %arg3[%c0_3, %c0_4] : memref<1x32xf32, #tpu.memory_space<vmem>>, vector<1x32xf32>
    %4 = vector.broadcast %3 : vector<1x32xf32> to vector<2x32xf32>
    %5 = arith.addf %2, %4 : vector<2x32xf32>
    %cst_5 = arith.constant 0.000000e+00 : f32
    %6 = vector.broadcast %cst_5 : f32 to vector<2x32xf32>
    %7 = arith.maximumf %5, %6 : vector<2x32xf32>
    %c0_6 = arith.constant 0 : index
    %c0_7 = arith.constant 0 : index
    %8 = vector.load %arg4[%c0_6, %c0_7] : memref<32x56xf32, #tpu.memory_space<vmem>>, vector<32x56xf32>
    %cst_8 = arith.constant dense<0.000000e+00> : vector<2x56xf32>
    %9 = tpu.matmul %7, %8, %cst_8 {dimension_numbers = #tpu.dot_dimension_numbers<[1], [0], [0], [1], [0, 0, 1, 1], [], []>} : vector<2x32xf32>, vector<32x56xf32>, vector<2x56xf32> -> vector<2x56xf32>
    %c0_9 = arith.constant 0 : index
    %c0_10 = arith.constant 0 : index
    %10 = vector.load %arg5[%c0_9, %c0_10] : memref<1x56xf32, #tpu.memory_space<vmem>>, vector<1x56xf32>
    %11 = vector.broadcast %10 : vector<1x56xf32> to vector<2x56xf32>
    %12 = arith.addf %9, %11 : vector<2x56xf32>
    %cst_11 = arith.constant 0.000000e+00 : f32
    %13 = vector.broadcast %cst_11 : f32 to vector<2x56xf32>
    %14 = arith.maximumf %12, %13 : vector<2x56xf32>
    %c0_12 = arith.constant 0 : index
    %c0_13 = arith.constant 0 : index
    %15 = vector.load %arg6[%c0_12, %c0_13] : memref<56x4xf32, #tpu.memory_space<vmem>>, vector<56x4xf32>
    %cst_14 = arith.constant dense<0.000000e+00> : vector<2x4xf32>
    %16 = tpu.matmul %14, %15, %cst_14 {dimension_numbers = #tpu.dot_dimension_numbers<[1], [0], [0], [1], [0, 0, 1, 1], [], []>} : vector<2x56xf32>, vector<56x4xf32>, vector<2x4xf32> -> vector<2x4xf32>
    %c0_15 = arith.constant 0 : index
    %c0_16 = arith.constant 0 : index
    %17 = vector.load %arg7[%c0_15, %c0_16] : memref<1x4xf32, #tpu.memory_space<vmem>>, vector<1x4xf32>
    %18 = vector.broadcast %17 : vector<1x4xf32> to vector<2x4xf32>
    %19 = arith.addf %16, %18 : vector<2x4xf32>
    %c0_17 = arith.constant 0 : index
    %c0_18 = arith.constant 0 : index
    %20 = vector.load %arg8[%c0_17, %c0_18] : memref<2x4xf32, #tpu.memory_space<vmem>>, vector<2x4xf32>
    tpu.vector_store %arg8[%c0_17, %c0_18], %19 {strides = array<i32>} : memref<2x4xf32, #tpu.memory_space<vmem>>, vector<2x4xf32>,
    return
  }
  func.func @transform_0(%arg0: i32) -> (i32, i32) {
    %c0_i32 = arith.constant 0 : i32
    %c0_i32_0 = arith.constant 0 : i32
    return %arg0, %c0_i32 : i32, i32
  }
  func.func @transform_1(%arg0: i32) -> (i32, i32) {
    %c0_i32 = arith.constant 0 : i32
    %c0_i32_0 = arith.constant 0 : i32
    %c0_i32_1 = arith.constant 0 : i32
    return %c0_i32, %c0_i32_0 : i32, i32
  }
  func.func @transform_2(%arg0: i32) -> (i32, i32) {
    %c0_i32 = arith.constant 0 : i32
    %c0_i32_0 = arith.constant 0 : i32
    %c0_i32_1 = arith.constant 0 : i32
    return %c0_i32, %c0_i32_0 : i32, i32
  }
  func.func @transform_3(%arg0: i32) -> (i32, i32) {
    %c0_i32 = arith.constant 0 : i32
    %c0_i32_0 = arith.constant 0 : i32
    %c0_i32_1 = arith.constant 0 : i32
    return %c0_i32, %c0_i32_0 : i32, i32
  }
  func.func @transform_4(%arg0: i32) -> (i32, i32) {
    %c0_i32 = arith.constant 0 : i32
    %c0_i32_0 = arith.constant 0 : i32
    %c0_i32_1 = arith.constant 0 : i32
    return %c0_i32, %c0_i32_0 : i32, i32
  }
  func.func @transform_5(%arg0: i32) -> (i32, i32) {
    %c0_i32 = arith.constant 0 : i32
    %c0_i32_0 = arith.constant 0 : i32
    %c0_i32_1 = arith.constant 0 : i32
    return %c0_i32, %c0_i32_0 : i32, i32
  }
  func.func @transform_6(%arg0: i32) -> (i32, i32) {
    %c0_i32 = arith.constant 0 : i32
    %c0_i32_0 = arith.constant 0 : i32
    %c0_i32_1 = arith.constant 0 : i32
    return %c0_i32, %c0_i32_0 : i32, i32
  }
  func.func @transform_7(%arg0: i32) -> (i32, i32) {
    %c0_i32 = arith.constant 0 : i32
    %c0_i32_0 = arith.constant 0 : i32
    return %arg0, %c0_i32 : i32, i32
  }
}

</mosaic_0001>

<llo_original>
// kernel: tpu_custom_call.1
$region0: #{tpu_custom_call.1}
  #allocation0 [shape = 'u32[]', space=smem, size = 0x4, offset = 0x4, fixed_abs, tag = 'smem constant byte address 0x4 - core index']
  #allocation1 [shape = 'u32[144,128]{1,0:T(1,128)}', space=vmem, size = 0x12000, scoped, tag = 'internal scratch']
  %s0 = inlined_call_operand.vmem [shape: f32[2,8], index: 0, kind: input, shape index: {}]
  %s1 = inlined_call_operand.vmem [shape: f32[8,32], index: 1, kind: input, shape index: {}]
  %s2 = inlined_call_operand.vmem [shape: f32[1,32], index: 2, kind: input, shape index: {}]
  %s3 = inlined_call_operand.vmem [shape: f32[32,56], index: 3, kind: input, shape index: {}]
  %s4 = inlined_call_operand.vmem [shape: f32[1,56], index: 4, kind: input, shape index: {}]
  %s5 = inlined_call_operand.vmem [shape: f32[56,4], index: 5, kind: input, shape index: {}]
  %s6 = inlined_call_operand.vmem [shape: f32[1,4], index: 6, kind: input, shape index: {}]
  %s7 = inlined_call_operand.hbm [shape: f32[2,4], index: 7, kind: output, shape index: {}]
  %s8 = sld [smem:[#allocation0]]
  $region38: #{tpu_custom_call.1} parent=0
    _
  %s10 = ssub.s32 1, %s8
  %s11 = scalar_select 0, %s10, %s8
  $region1: #{tpu_custom_call.1} parent=0
    #allocation2 [shape = 'u8[1024]{0}', space=vmem, size = 0x400, scoped, tag = 'output window, operand 0, single buffered']
    #allocation3 [shape = 's32[1]{0}', space=sflag, size = 0x4, scoped, tag = 'scoped memory for tpu_custom_call.1']
    %12 = vsyncpa [#allocation3], 0
    // Predicated region
    $region2: #{tpu_custom_call.1} parent=1 // pred_check
      _
    $region3: #{tpu_custom_call.1} parent=1 // pred_check_branch
      %14 = sbr.rel (0) target = $region5
    $region4: #{tpu_custom_call.1} parent=1 // pred_region
      _
    $region5: #{tpu_custom_call.1} parent=1 // pred_fallthru
      _
    // Predicated region
    $region6: #{tpu_custom_call.1} parent=1 // pred_check
      _
    $region7: #{tpu_custom_call.1} parent=1 // pred_check_branch
      %16 = sbr.rel (0) target = $region9
    $region8: #{tpu_custom_call.1} parent=1 // pred_region
      _
    $region9: #{tpu_custom_call.1} parent=1 // pred_fallthru
      _
    // Predicated region
    $region10: #{tpu_custom_call.1} parent=1 // pred_check
      _
    $region11: #{tpu_custom_call.1} parent=1 // pred_check_branch
      %18 = sbr.rel (0) target = $region13
    $region12: #{tpu_custom_call.1} parent=1 // pred_region
      _
    $region13: #{tpu_custom_call.1} parent=1 // pred_fallthru
      _
    // Predicated region
    $region14: #{tpu_custom_call.1} parent=1 // pred_check
      _
    $region15: #{tpu_custom_call.1} parent=1 // pred_check_branch
      %20 = sbr.rel (0) target = $region17
    $region16: #{tpu_custom_call.1} parent=1 // pred_region
      _
    $region17: #{tpu_custom_call.1} parent=1 // pred_fallthru
      _
    // Predicated region
    $region18: #{tpu_custom_call.1} parent=1 // pred_check
      _
    $region19: #{tpu_custom_call.1} parent=1 // pred_check_branch
      %22 = sbr.rel (0) target = $region21
    $region20: #{tpu_custom_call.1} parent=1 // pred_region
      _
    $region21: #{tpu_custom_call.1} parent=1 // pred_fallthru
      _
    // Predicated region
    $region22: #{tpu_custom_call.1} parent=1 // pred_check
      _
    $region23: #{tpu_custom_call.1} parent=1 // pred_check_branch
      %24 = sbr.rel (0) target = $region25
    $region24: #{tpu_custom_call.1} parent=1 // pred_region
      _
    $region25: #{tpu_custom_call.1} parent=1 // pred_fallthru
      _
    // Predicated region
    $region26: #{tpu_custom_call.1} parent=1 // pred_check
      _
    $region27: #{tpu_custom_call.1} parent=1 // pred_check_branch
      %26 = sbr.rel (0) target = $region29
    $region28: #{tpu_custom_call.1} parent=1 // pred_region
      _
    $region29: #{tpu_custom_call.1} parent=1 // pred_fallthru
      _
    %v27 = vld [vmem:[%s0] sm:$0x3]
    %v28 = vld [vmem:[%s1] sm:$0xff]
    %v29 = vld [vmem:[%s2] sm:$0x1]
    %v31 = vlaneseq
    %v32 = vshrl.u32 %v31, 7
    %v33 = vsub.s32 0, %v32
    %v34 = vrot.slane %v29, %v33
    %vm36 = vcmask 64512
    %v38 = vsel %vm36, %v27, 0
    %40 = vmatprep.subr.mxu0 0.0
    %41 = vmatpush1.msra.mxu0 %v28
    %42 = vmatprep.subr.mxu0 0.0
    %43 = vmatpush1.msra.mxu0 0.0
    %44 = vmatprep.subr.mxu0 0.0
    %45 = vmatpush1.msra.mxu0 0.0
    %46 = vmatprep.subr.mxu0 0.0
    %47 = vmatpush1.msra.mxu0 0.0
    %48 = vmatprep.subr.mxu0 0.0
    %49 = vmatpush1.msra.mxu0 0.0
    %50 = vmatprep.subr.mxu0 0.0
    %51 = vmatpush1.msra.mxu0 0.0
    %52 = vmatprep.subr.mxu0 0.0
    %53 = vmatpush1.msra.mxu0 0.0
    %54 = vmatprep.subr.mxu0 0.0
    %55 = vmatpush1.msra.mxu0 0.0
    %56 = vmatprep.subr.mxu0 0.0
    %57 = vmatpush1.msra.mxu0 0.0
    %58 = vmatprep.subr.mxu0 0.0
    %59 = vmatpush1.msra.mxu0 0.0
    %60 = vmatprep.subr.mxu0 0.0
    %61 = vmatpush1.msra.mxu0 0.0
    %62 = vmatprep.subr.mxu0 0.0
    %63 = vmatpush1.msra.mxu0 0.0
    %64 = vmatprep.subr.mxu0 0.0
    %65 = vmatpush1.msra.mxu0 0.0
    %66 = vmatprep.subr.mxu0 0.0
    %67 = vmatpush1.msra.mxu0 0.0
    %68 = vmatprep.subr.mxu0 0.0
    %69 = vmatpush1.msra.mxu0 0.0
    %70 = vmatprep.subr.mxu0 0.0
    %71 = vmatpush1.msra.mxu0 0.0
    %72 = vmatprep.subr.mxu0 0.0
    %73 = vmatpush1.msra.mxu0 0.0
    %74 = vmatprep.subr.mxu0 0.0
    %75 = vmatpush1.msra.mxu0 0.0
    %76 = vmatprep.subr.mxu0 0.0
    %77 = vmatpush1.msra.mxu0 0.0
    %78 = vmatprep.subr.mxu0 0.0
    %79 = vmatpush1.msra.mxu0 0.0
    %80 = vmatprep.subr.mxu0 0.0
    %81 = vmatpush1.msra.mxu0 0.0
    %82 = vmatprep.subr.mxu0 0.0
    %83 = vmatpush1.msra.mxu0 0.0
    %84 = vmatprep.subr.mxu0 0.0
    %85 = vmatpush1.msra.mxu0 0.0
    %86 = vmatprep.subr.mxu0 0.0
    %87 = vmatpush1.msra.mxu0 0.0
    %88 = vmatprep.subr.mxu0 0.0
    %89 = vmatpush1.msra.mxu0 0.0
    %90 = vmatprep.subr.mxu0 0.0
    %91 = vmatpush1.msra.mxu0 0.0
    %92 = vmatprep.subr.mxu0 0.0
    %93 = vmatpush1.msra.mxu0 0.0
    %94 = vmatprep.subr.mxu0 0.0
    %95 = vmatpush1.msra.mxu0 0.0
    %96 = vmatprep.subr.mxu0 0.0
    %97 = vmatpush1.msra.mxu0 0.0
    %98 = vmatprep.subr.mxu0 0.0
    %99 = vmatpush1.msra.mxu0 0.0
    %100 = vmatprep.subr.mxu0 0.0
    %101 = vmatpush1.msra.mxu0 0.0
    %102 = vmatprep.subr.mxu0 0.0
    %103 = vmatpush1.msra.mxu0 0.0
    %104 = vmatprep.mubr.f32.mxu0 0.0
    %105 = vmatmul.mubr.f32.gmra.mrb[0].mxu0 %v38
    %v106 = vpop.f32.mrb[0].mxu0
    %v107 = vadd.f32 %v34, %v106
    %v108 = vpop.f32.mrb[0].mxu0
    %109 = vdwg.mxu0
    %v110 = vmax.f32 %v107, 0.0
    %v111 = vld [vmem:[%s3] sm:$0xff]
    %v112 = vld [vmem:[%s3 + $0x8] sm:$0xff]
    %v113 = vld [vmem:[%s3 + $0x10] sm:$0xff]
    %v114 = vld [vmem:[%s3 + $0x18] sm:$0xff]
    %v115 = vld [vmem:[%s4] sm:$0x1]
    %v117 = vlaneseq
    %v118 = vshrl.u32 %v117, 7
    %v119 = vsub.s32 0, %v118
    %v120 = vrot.slane %v115, %v119
    %vm122 = vcmask 261120
    %v124 = vsel %vm122, %v110, 0
    %126 = vmatprep.subr.mxu0 0.0
    %127 = vmatpush1.msra.mxu0 %v111
    %128 = vmatprep.subr.mxu0 0.0
    %129 = vmatpush1.msra.mxu0 %v112
    %130 = vmatprep.subr.mxu0 0.0
    %131 = vmatpush1.msra.mxu0 %v113
    %132 = vmatprep.subr.mxu0 0.0
    %133 = vmatpush1.msra.mxu0 %v114
    %134 = vmatprep.subr.mxu0 0.0
    %135 = vmatpush1.msra.mxu0 0.0
    %136 = vmatprep.subr.mxu0 0.0
    %137 = vmatpush1.msra.mxu0 0.0
    %138 = vmatprep.subr.mxu0 0.0
    %139 = vmatpush1.msra.mxu0 0.0
    %140 = vmatprep.subr.mxu0 0.0
    %141 = vmatpush1.msra.mxu0 0.0
    %142 = vmatprep.subr.mxu0 0.0
    %143 = vmatpush1.msra.mxu0 0.0
    %144 = vmatprep.subr.mxu0 0.0
    %145 = vmatpush1.msra.mxu0 0.0
    %146 = vmatprep.subr.mxu0 0.0
    %147 = vmatpush1.msra.mxu0 0.0
    %148 = vmatprep.subr.mxu0 0.0
    %149 = vmatpush1.msra.mxu0 0.0
    %150 = vmatprep.subr.mxu0 0.0
    %151 = vmatpush1.msra.mxu0 0.0
    %152 = vmatprep.subr.mxu0 0.0
    %153 = vmatpush1.msra.mxu0 0.0
    %154 = vmatprep.subr.mxu0 0.0
    %155 = vmatpush1.msra.mxu0 0.0
    %156 = vmatprep.subr.mxu0 0.0
    %157 = vmatpush1.msra.mxu0 0.0
    %158 = vmatprep.subr.mxu0 0.0
    %159 = vmatpush1.msra.mxu0 0.0
    %160 = vmatprep.subr.mxu0 0.0
    %161 = vmatpush1.msra.mxu0 0.0
    %162 = vmatprep.subr.mxu0 0.0
    %163 = vmatpush1.msra.mxu0 0.0
    %164 = vmatprep.subr.mxu0 0.0
    %165 = vmatpush1.msra.mxu0 0.0
    %166 = vmatprep.subr.mxu0 0.0
    %167 = vmatpush1.msra.mxu0 0.0
    %168 = vmatprep.subr.mxu0 0.0
    %169 = vmatpush1.msra.mxu0 0.0
    %170 = vmatprep.subr.mxu0 0.0
    %171 = vmatpush1.msra.mxu0 0.0
    %172 = vmatprep.subr.mxu0 0.0
    %173 = vmatpush1.msra.mxu0 0.0
    %174 = vmatprep.subr.mxu0 0.0
    %175 = vmatpush1.msra.mxu0 0.0
    %176 = vmatprep.subr.mxu0 0.0
    %177 = vmatpush1.msra.mxu0 0.0
    %178 = vmatprep.subr.mxu0 0.0
    %179 = vmatpush1.msra.mxu0 0.0
    %180 = vmatprep.subr.mxu0 0.0
    %181 = vmatpush1.msra.mxu0 0.0
    %182 = vmatprep.subr.mxu0 0.0
    %183 = vmatpush1.msra.mxu0 0.0
    %184 = vmatprep.subr.mxu0 0.0
    %185 = vmatpush1.msra.mxu0 0.0
    %186 = vmatprep.subr.mxu0 0.0
    %187 = vmatpush1.msra.mxu0 0.0
    %188 = vmatprep.subr.mxu0 0.0
    %189 = vmatpush1.msra.mxu0 0.0
    %190 = vmatprep.mubr.f32.mxu0 0.0
    %191 = vmatmul.mubr.f32.gmra.mrb[0].mxu0 %v124
    %v192 = vpop.f32.mrb[0].mxu0
    %v193 = vadd.f32 %v120, %v192
    %v194 = vpop.f32.mrb[0].mxu0
    %195 = vdwg.mxu0
    %v196 = vmax.f32 %v193, 0.0
    %v197 = vld [vmem:[%s5] sm:$0xff]
    %v198 = vld [vmem:[%s5 + $0x8] sm:$0xff]
    %v199 = vld [vmem:[%s5 + $0x10] sm:$0xff]
    %v200 = vld [vmem:[%s5 + $0x18] sm:$0xff]
    %v201 = vld [vmem:[%s5 + $0x20] sm:$0xff]
    %v202 = vld [vmem:[%s5 + $0x28] sm:$0xff]
    %v203 = vld [vmem:[%s5 + $0x30] sm:$0xff]
    %v204 = vld [vmem:[%s6] sm:$0x1]
    %v206 = vlaneseq
    %v207 = vshrl.u32 %v206, 7
    %v208 = vsub.s32 0, %v207
    %v209 = vrot.slane %v204, %v208
    %vm211 = vcmask 457728
    %v213 = vsel %vm211, %v196, 0
    %215 = vmatprep.subr.mxu0 0.0
    %216 = vmatpush1.msra.mxu0 %v197
    %217 = vmatprep.subr.mxu0 0.0
    %218 = vmatpush1.msra.mxu0 %v198
    %219 = vmatprep.subr.mxu0 0.0
    %220 = vmatpush1.msra.mxu0 %v199
    %221 = vmatprep.subr.mxu0 0.0
    %222 = vmatpush1.msra.mxu0 %v200
    %223 = vmatprep.subr.mxu0 0.0
    %224 = vmatpush1.msra.mxu0 %v201
    %225 = vmatprep.subr.mxu0 0.0
    %226 = vmatpush1.msra.mxu0 %v202
    %227 = vmatprep.subr.mxu0 0.0
    %228 = vmatpush1.msra.mxu0 %v203
    %229 = vmatprep.subr.mxu0 0.0
    %230 = vmatpush1.msra.mxu0 0.0
    %231 = vmatprep.subr.mxu0 0.0
    %232 = vmatpush1.msra.mxu0 0.0
    %233 = vmatprep.subr.mxu0 0.0
    %234 = vmatpush1.msra.mxu0 0.0
    %235 = vmatprep.subr.mxu0 0.0
    %236 = vmatpush1.msra.mxu0 0.0
    %237 = vmatprep.subr.mxu0 0.0
    %238 = vmatpush1.msra.mxu0 0.0
    %239 = vmatprep.subr.mxu0 0.0
    %240 = vmatpush1.msra.mxu0 0.0
    %241 = vmatprep.subr.mxu0 0.0
    %242 = vmatpush1.msra.mxu0 0.0
    %243 = vmatprep.subr.mxu0 0.0
    %244 = vmatpush1.msra.mxu0 0.0
    %245 = vmatprep.subr.mxu0 0.0
    %246 = vmatpush1.msra.mxu0 0.0
    %247 = vmatprep.subr.mxu0 0.0
    %248 = vmatpush1.msra.mxu0 0.0
    %249 = vmatprep.subr.mxu0 0.0
    %250 = vmatpush1.msra.mxu0 0.0
    %251 = vmatprep.subr.mxu0 0.0
    %252 = vmatpush1.msra.mxu0 0.0
    %253 = vmatprep.subr.mxu0 0.0
    %254 = vmatpush1.msra.mxu0 0.0
    %255 = vmatprep.subr.mxu0 0.0
    %256 = vmatpush1.msra.mxu0 0.0
    %257 = vmatprep.subr.mxu0 0.0
    %258 = vmatpush1.msra.mxu0 0.0
    %259 = vmatprep.subr.mxu0 0.0
    %260 = vmatpush1.msra.mxu0 0.0
    %261 = vmatprep.subr.mxu0 0.0
    %262 = vmatpush1.msra.mxu0 0.0
    %263 = vmatprep.subr.mxu0 0.0
    %264 = vmatpush1.msra.mxu0 0.0
    %265 = vmatprep.subr.mxu0 0.0
    %266 = vmatpush1.msra.mxu0 0.0
    %267 = vmatprep.subr.mxu0 0.0
    %268 = vmatpush1.msra.mxu0 0.0
    %269 = vmatprep.subr.mxu0 0.0
    %270 = vmatpush1.msra.mxu0 0.0
    %271 = vmatprep.subr.mxu0 0.0
    %272 = vmatpush1.msra.mxu0 0.0
    %273 = vmatprep.subr.mxu0 0.0
    %274 = vmatpush1.msra.mxu0 0.0
    %275 = vmatprep.subr.mxu0 0.0
    %276 = vmatpush1.msra.mxu0 0.0
    %277 = vmatprep.subr.mxu0 0.0
    %278 = vmatpush1.msra.mxu0 0.0
    %279 = vmatprep.mubr.f32.mxu0 0.0
    %280 = vmatmul.mubr.f32.gmra.mrb[0].mxu0 %v213
    %v281 = vpop.f32.mrb[0].mxu0
    %v282 = vadd.f32 %v209, %v281
    %v283 = vpop.f32.mrb[0].mxu0
    %284 = vdwg.mxu0
    %vm285 = vcmask 25600
    %286 = vst.msk [vmem:[#allocation2] sm:$0x3] %vm285, %v282
    // Predicated region
    $region30: #{tpu_custom_call.1} parent=1 // pred_check
      _
    $region31: #{tpu_custom_call.1} parent=1 // pred_check_branch
      %288 = sbr.rel (0) target = $region33
    $region32: #{tpu_custom_call.1} parent=1 // pred_region
      %s290 = ssub.s32 32, 32
      %291 = vsyncadd [#allocation3], %s290
      %s293 = sshll.u32 [#allocation2], 4
      %s294 = int_to_ptr.vmem [resolvable:$true] %s293
      %296 = dma.vmem_to_hbm [thread:$0]  %s294, 32, %s7, [#allocation3]
    $region33: #{tpu_custom_call.1} parent=1 // pred_fallthru
      _
    // Predicated region
    $region34: #{tpu_custom_call.1} parent=1 // pred_check
      _
    $region35: #{tpu_custom_call.1} parent=1 // pred_check_branch
      %298 = sbr.rel (0) target = $region37
    $region36: #{tpu_custom_call.1} parent=1 // pred_region
      %299 = dma.done [#allocation3], 32
    $region37: #{tpu_custom_call.1} parent=1 // pred_fallthru
      _
    %300 = vsyncpa [#allocation3], 1

</llo_original>
